<compile_context>
chip_gen: v6e
topology: v6e:2x2x1
jax: 0.10.0
libtpu: 0.0.40
codegen_flags: <defaults>
</compile_context>

<pallas_src>
import itertools
import numpy as np
import jax
import jax.numpy as jnp
from jax.experimental import pallas as pl
from jax.experimental.pallas import tpu as pltpu


# ---------------------------------------------------------------------------
# Deterministic parameter tables (exactly the module __init__ constants).
# ---------------------------------------------------------------------------
_Y_TABLE = np.array(
    [[16, 11, 10, 16, 24, 40, 51, 61],
     [12, 12, 14, 19, 26, 58, 60, 55],
     [14, 13, 16, 24, 40, 57, 69, 56],
     [14, 17, 22, 29, 51, 87, 80, 62],
     [18, 22, 37, 56, 68, 109, 103, 77],
     [24, 35, 55, 64, 81, 104, 113, 92],
     [49, 64, 78, 87, 103, 121, 120, 101],
     [72, 92, 95, 98, 112, 100, 103, 99]], dtype=np.float32).T  # standard JPEG Y table (T)


def _make_c_table():
    c = np.empty((8, 8), dtype=np.float32)
    c.fill(99)
    c[:4, :4] = np.array([[17, 18, 24, 47], [18, 21, 26, 66],
                          [24, 26, 56, 99], [47, 66, 99, 99]], dtype=np.float32).T
    return c


_C_TABLE = _make_c_table()


def _make_idct_consts():
    alpha = np.array([1.0 / np.sqrt(2)] + [1.0] * 7)
    alpha = np.outer(alpha, alpha).astype(np.float32)               # (8, 8)
    t = np.zeros((8, 8, 8, 8), dtype=np.float32)
    for x, y, u, v in itertools.product(range(8), repeat=4):
        t[x, y, u, v] = (np.cos((2 * u + 1) * x * np.pi / 16) *
                         np.cos((2 * v + 1) * y * np.pi / 16))
    return alpha, t


_ALPHA, _IDCT_T = _make_idct_consts()

# Separable IDCT basis: D[x, u] = cos((2u+1) * x * pi / 16); per 8x8 block:
#   idct(blk) = D^T @ blk @ D     (blk already scaled by table*factor*alpha*0.25)
_D = np.array([[np.cos((2 * u + 1) * x * np.pi / 16) for u in range(8)]
               for x in range(8)], dtype=np.float32)


def _block_diag(mat8, k):
    return np.kron(np.eye(k, dtype=np.float32), mat8.astype(np.float32))


def _upsample_rows(n_out):
    """(n_out, n_out//2) 0/1 matrix: out[i, :] = in[i // 2, :]  (exact 2x NN)."""
    u = np.zeros((n_out, n_out // 2), np.float32)
    u[np.arange(n_out), np.arange(n_out) // 2] = 1.0
    return u


def _upsample_cols(n_out):
    """(n_out//2, n_out) 0/1 matrix: out[:, j] = in[:, j // 2]  (exact 2x NN)."""
    u = np.zeros((n_out // 2, n_out), np.float32)
    u[np.arange(n_out) // 2, np.arange(n_out)] = 1.0
    return u


# ---------------------------------------------------------------------------
# XLA-side glue: block layout -> scaled coefficient image
# (the elementwise dequant * alpha * 0.25 fuses into this transpose for free)
# ---------------------------------------------------------------------------
def _coeff_image(patches, height, width, table, factor):
    """(B, H*W/64, 8, 8) quantized DCT blocks -> (B, H, W) scaled coefficient image."""
    # TODO(synk): `factor` is folded at trace time; pass it as an SMEM scalar if it ever
    # needs to be a traced (jitted) value.
    B = patches.shape[0]
    scale = jnp.asarray(np.asarray(table, np.float32) * float(factor) * _ALPHA * 0.25)
    x = patches.astype(jnp.float32) * scale                      # (B, N, 8, 8)
    x = x.reshape(B, height // 8, width // 8, 8, 8)
    x = jnp.transpose(x, (0, 1, 3, 2, 4))
    return x.reshape(B, height, width)


# ---------------------------------------------------------------------------
# Fused kernel: block IDCT (Y + chroma) + 2x chroma upsample + YCbCr->RGB
#               + clamp[0,255] + /255
# ---------------------------------------------------------------------------
def _decode_kernel(yc_ref, cbc_ref, crc_ref, ly_ref, ry_ref, ulc_ref, ruc_ref, o_ref):
    # Y plane: block-diagonal IDCT matmuls on the lane-dense (TH, TW) coefficient tile.
    y = jnp.dot(jnp.dot(ly_ref[...], yc_ref[0], preferred_element_type=jnp.float32),
                ry_ref[...], preferred_element_type=jnp.float32) + 128.0

    # Chroma: IDCT + exact 2x nearest-neighbor upsample folded into one matrix pair.
    # (+128 from idct and -128 from the color shift cancel, so neither is applied.)
    cb = jnp.dot(jnp.dot(ulc_ref[...], cbc_ref[0], preferred_element_type=jnp.float32),
                 ruc_ref[...], preferred_element_type=jnp.float32)
    cr = jnp.dot(jnp.dot(ulc_ref[...], crc_ref[0], preferred_element_type=jnp.float32),
                 ruc_ref[...], preferred_element_type=jnp.float32)

    r = y + 1.402 * cr
    g = y - 0.344136 * cb - 0.714136 * cr
    b = y + 1.772 * cb

    def _finish(v):
        return jnp.minimum(255.0, jnp.maximum(0.0, v)) * (1.0 / 255.0)

    o_ref[0, 0] = _finish(r)
    o_ref[0, 1] = _finish(g)
    o_ref[0, 2] = _finish(b)


def _pick_tiles(H, W):
    TH = H                                     # fallback: full extent (always legal)
    for t in (128, 64, 32, 16):                # TH mult of 16 -> chroma sublane mult of 8
        if H % t == 0:
            TH = t
            break
    TW = W
    for t in (256, 512):                       # TW mult of 256 -> chroma lane mult of 128
        if W % t == 0:
            TW = t
            break
    return TH, TW


# ---------------------------------------------------------------------------
# Full decompress_jpeg forward
# ---------------------------------------------------------------------------
def decompress_jpeg(y, cb, cr, height, width, factor=1.0):
    B = y.shape[0]
    H, W = int(height), int(width)
    assert H % 16 == 0 and W % 16 == 0, "4:2:0 JPEG decode expects H, W multiples of 16"

    yc = _coeff_image(y, H, W, _Y_TABLE, factor)           # (B, H, W)
    cbc = _coeff_image(cb, H // 2, W // 2, _C_TABLE, factor)
    crc = _coeff_image(cr, H // 2, W // 2, _C_TABLE, factor)

    TH, TW = _pick_tiles(H, W)

    l_y = _block_diag(_D.T, TH // 8)                                   # (TH, TH)
    r_y = _block_diag(_D, TW // 8)                                     # (TW, TW)
    ul_c = _upsample_rows(TH) @ _block_diag(_D.T, TH // 16)            # (TH, TH//2)
    ru_c = _block_diag(_D, TW // 16) @ _upsample_cols(TW)              # (TW//2, TW)

    return pl.pallas_call(
        _decode_kernel,
        out_shape=jax.ShapeDtypeStruct((B, 3, H, W), jnp.float32),
        grid_spec=pltpu.PrefetchScalarGridSpec(
            num_scalar_prefetch=0,
            grid=(B, H // TH, W // TW),
            in_specs=[
                pl.BlockSpec((1, TH, TW), lambda b, i, j: (b, i, j)),
                pl.BlockSpec((1, TH // 2, TW // 2), lambda b, i, j: (b, i, j)),
                pl.BlockSpec((1, TH // 2, TW // 2), lambda b, i, j: (b, i, j)),
                pl.BlockSpec((TH, TH), lambda b, i, j: (0, 0)),
                pl.BlockSpec((TW, TW), lambda b, i, j: (0, 0)),
                pl.BlockSpec((TH, TH // 2), lambda b, i, j: (0, 0)),
                pl.BlockSpec((TW // 2, TW), lambda b, i, j: (0, 0)),
            ],
            out_specs=pl.BlockSpec((1, 3, TH, TW), lambda b, i, j: (b, 0, i, j)),
        ),
        compiler_params=pltpu.CompilerParams(
            dimension_semantics=("parallel", "parallel", "parallel")),
    )(yc, cbc, crc,
      jnp.asarray(l_y), jnp.asarray(r_y), jnp.asarray(ul_c), jnp.asarray(ru_c))


# ---------------------------------------------------------------------------
# Pure-JAX reference (same math as the PyTorch module) for a sanity check
# ---------------------------------------------------------------------------
def _block_merging_ref(patches, height, width):
    k = 8
    B = patches.shape[0]
    x = patches.reshape(B, height // k, width // k, k, k)
    x = jnp.transpose(x, (0, 1, 3, 2, 4))
    return x.reshape(B, height, width)


def _reference(y, cb, cr, height, width, factor=1.0):
    alpha = jnp.asarray(_ALPHA)
    idct_t = jnp.asarray(_IDCT_T)

    def idct(img, table):
        img = img * (jnp.asarray(table) * factor)
        img = img * alpha
        return 0.25 * jnp.tensordot(img, idct_t, axes=2) + 128.0

    def up(x, k=2):
        return jnp.repeat(jnp.repeat(x, k, axis=1), k, axis=2)

    y_img = _block_merging_ref(idct(y, _Y_TABLE), height, width)
    cb_img = up(_block_merging_ref(idct(cb, _C_TABLE), height // 2, width // 2))
    cr_img = up(_block_merging_ref(idct(cr, _C_TABLE), height // 2, width // 2))
    img = jnp.stack([y_img, cb_img, cr_img], axis=-1)                # (B, H, W, 3)
    shift = jnp.array([0.0, -128.0, -128.0], jnp.float32)
    mat = jnp.asarray(np.array([[1.0, 0.0, 1.402],
                                [1.0, -0.344136, -0.714136],
                                [1.0, 1.772, 0.0]], dtype=np.float32).T)
    out = jnp.tensordot(img + shift, mat, axes=1)
    out = jnp.transpose(out, (0, 3, 1, 2))
    out = jnp.minimum(255.0, jnp.maximum(0.0, out))
    return out / 255.0


if __name__ == "__main__":
    B, H, W = 2, 16, 16
    n_y = (H * W) // 64
    n_c = ((H // 2) * (W // 2)) // 64

    key = jax.random.PRNGKey(0)
    ky, kcb, kcr = jax.random.split(key, 3)
    # quantized DCT coefficients (rounded integers as floats, small magnitude)
    y = jnp.round(8.0 * jax.random.normal(ky, (B, n_y, 8, 8), jnp.float32))
    cb = jnp.round(4.0 * jax.random.normal(kcb, (B, n_c, 8, 8), jnp.float32))
    cr = jnp.round(4.0 * jax.random.normal(kcr, (B, n_c, 8, 8), jnp.float32))

    out = decompress_jpeg(y, cb, cr, H, W, factor=1.0)
    out = jax.block_until_ready(out)

    ref = jax.block_until_ready(_reference(y, cb, cr, H, W, factor=1.0))
    assert out.shape == (B, 3, H, W), out.shape
    np.testing.assert_allclose(np.asarray(out), np.asarray(ref), rtol=1e-4, atol=1e-4)

    print("KERNEL_OK")
</pallas_src>

<mosaic_0001>
module attributes {stable_mosaic.version = 11 : i64} {
  func.func @_decode_kernel(%arg0: i32, %arg1: i32, %arg2: i32, %arg3: memref<1x16x16xf32, #tpu.memory_space<vmem>>, %arg4: memref<1x8x8xf32, #tpu.memory_space<vmem>>, %arg5: memref<1x8x8xf32, #tpu.memory_space<vmem>>, %arg6: memref<16x16xf32, #tpu.memory_space<vmem>>, %arg7: memref<16x16xf32, #tpu.memory_space<vmem>>, %arg8: memref<16x8xf32, #tpu.memory_space<vmem>>, %arg9: memref<8x16xf32, #tpu.memory_space<vmem>>, %arg10: memref<1x3x16x16xf32, #tpu.memory_space<vmem>>) attributes {dimension_semantics = [#tpu.dimension_semantics<parallel>, #tpu.dimension_semantics<parallel>, #tpu.dimension_semantics<parallel>], iteration_bounds = array<i64: 2, 1, 1>, scalar_prefetch = 0 : i64, scratch_operands = 0 : i64, tpu.core_type = #tpu.core_type<tc>, window_params = [{transform_indices = @transform_0, window_bounds = array<i64: 1, 16, 16>}, {transform_indices = @transform_1, window_bounds = array<i64: 1, 8, 8>}, {transform_indices = @transform_2, window_bounds = array<i64: 1, 8, 8>}, {pipeline_mode = #tpu.pipeline_mode<synchronous>, transform_indices = @transform_3, window_bounds = array<i64: 16, 16>}, {pipeline_mode = #tpu.pipeline_mode<synchronous>, transform_indices = @transform_4, window_bounds = array<i64: 16, 16>}, {pipeline_mode = #tpu.pipeline_mode<synchronous>, transform_indices = @transform_5, window_bounds = array<i64: 16, 8>}, {pipeline_mode = #tpu.pipeline_mode<synchronous>, transform_indices = @transform_6, window_bounds = array<i64: 8, 16>}, {transform_indices = @transform_7, window_bounds = array<i64: 1, 3, 16, 16>}]} {
    %c0 = arith.constant 0 : index
    %c0_0 = arith.constant 0 : index
    %0 = vector.load %arg6[%c0, %c0_0] : memref<16x16xf32, #tpu.memory_space<vmem>>, vector<16x16xf32>
    %c0_1 = arith.constant 0 : index
    %c0_2 = arith.constant 0 : index
    %c0_3 = arith.constant 0 : index
    %1 = vector.load %arg3[%c0_1, %c0_2, %c0_3] : memref<1x16x16xf32, #tpu.memory_space<vmem>>, vector<1x16x16xf32>
    %2 = vector.shape_cast %1 : vector<1x16x16xf32> to vector<16x16xf32>
    %cst = arith.constant dense<0.000000e+00> : vector<16x16xf32>
    %3 = tpu.matmul %0, %2, %cst {dimension_numbers = #tpu.dot_dimension_numbers<[1], [0], [0], [1], [0, 0, 1, 1], [], []>} : vector<16x16xf32>, vector<16x16xf32>, vector<16x16xf32> -> vector<16x16xf32>
    %c0_4 = arith.constant 0 : index
    %c0_5 = arith.constant 0 : index
    %4 = vector.load %arg7[%c0_4, %c0_5] : memref<16x16xf32, #tpu.memory_space<vmem>>, vector<16x16xf32>
    %cst_6 = arith.constant dense<0.000000e+00> : vector<16x16xf32>
    %5 = tpu.matmul %3, %4, %cst_6 {dimension_numbers = #tpu.dot_dimension_numbers<[1], [0], [0], [1], [0, 0, 1, 1], [], []>} : vector<16x16xf32>, vector<16x16xf32>, vector<16x16xf32> -> vector<16x16xf32>
    %cst_7 = arith.constant 1.280000e+02 : f32
    %6 = vector.broadcast %cst_7 : f32 to vector<16x16xf32>
    %7 = arith.addf %5, %6 : vector<16x16xf32>
    %c0_8 = arith.constant 0 : index
    %c0_9 = arith.constant 0 : index
    %8 = vector.load %arg8[%c0_8, %c0_9] : memref<16x8xf32, #tpu.memory_space<vmem>>, vector<16x8xf32>
    %c0_10 = arith.constant 0 : index
    %c0_11 = arith.constant 0 : index
    %c0_12 = arith.constant 0 : index
    %9 = vector.load %arg4[%c0_10, %c0_11, %c0_12] : memref<1x8x8xf32, #tpu.memory_space<vmem>>, vector<1x8x8xf32>
    %10 = vector.shape_cast %9 : vector<1x8x8xf32> to vector<8x8xf32>
    %cst_13 = arith.constant dense<0.000000e+00> : vector<16x8xf32>
    %11 = tpu.matmul %8, %10, %cst_13 {dimension_numbers = #tpu.dot_dimension_numbers<[1], [0], [0], [1], [0, 0, 1, 1], [], []>} : vector<16x8xf32>, vector<8x8xf32>, vector<16x8xf32> -> vector<16x8xf32>
    %c0_14 = arith.constant 0 : index
    %c0_15 = arith.constant 0 : index
    %12 = vector.load %arg9[%c0_14, %c0_15] : memref<8x16xf32, #tpu.memory_space<vmem>>, vector<8x16xf32>
    %cst_16 = arith.constant dense<0.000000e+00> : vector<16x16xf32>
    %13 = tpu.matmul %11, %12, %cst_16 {dimension_numbers = #tpu.dot_dimension_numbers<[1], [0], [0], [1], [0, 0, 1, 1], [], []>} : vector<16x8xf32>, vector<8x16xf32>, vector<16x16xf32> -> vector<16x16xf32>
    %c0_17 = arith.constant 0 : index
    %c0_18 = arith.constant 0 : index
    %14 = vector.load %arg8[%c0_17, %c0_18] : memref<16x8xf32, #tpu.memory_space<vmem>>, vector<16x8xf32>
    %c0_19 = arith.constant 0 : index
    %c0_20 = arith.constant 0 : index
    %c0_21 = arith.constant 0 : index
    %15 = vector.load %arg5[%c0_19, %c0_20, %c0_21] : memref<1x8x8xf32, #tpu.memory_space<vmem>>, vector<1x8x8xf32>
    %16 = vector.shape_cast %15 : vector<1x8x8xf32> to vector<8x8xf32>
    %cst_22 = arith.constant dense<0.000000e+00> : vector<16x8xf32>
    %17 = tpu.matmul %14, %16, %cst_22 {dimension_numbers = #tpu.dot_dimension_numbers<[1], [0], [0], [1], [0, 0, 1, 1], [], []>} : vector<16x8xf32>, vector<8x8xf32>, vector<16x8xf32> -> vector<16x8xf32>
    %c0_23 = arith.constant 0 : index
    %c0_24 = arith.constant 0 : index
    %18 = vector.load %arg9[%c0_23, %c0_24] : memref<8x16xf32, #tpu.memory_space<vmem>>, vector<8x16xf32>
    %cst_25 = arith.constant dense<0.000000e+00> : vector<16x16xf32>
    %19 = tpu.matmul %17, %18, %cst_25 {dimension_numbers = #tpu.dot_dimension_numbers<[1], [0], [0], [1], [0, 0, 1, 1], [], []>} : vector<16x8xf32>, vector<8x16xf32>, vector<16x16xf32> -> vector<16x16xf32>
    %cst_26 = arith.constant 1.402000e+00 : f32
    %20 = vector.broadcast %cst_26 : f32 to vector<16x16xf32>
    %21 = arith.mulf %20, %19 : vector<16x16xf32>
    %22 = arith.addf %7, %21 : vector<16x16xf32>
    %cst_27 = arith.constant 3.441360e-01 : f32
    %23 = vector.broadcast %cst_27 : f32 to vector<16x16xf32>
    %24 = arith.mulf %23, %13 : vector<16x16xf32>
    %25 = arith.subf %7, %24 : vector<16x16xf32>
    %cst_28 = arith.constant 7.141360e-01 : f32
    %26 = vector.broadcast %cst_28 : f32 to vector<16x16xf32>
    %27 = arith.mulf %26, %19 : vector<16x16xf32>
    %28 = arith.subf %25, %27 : vector<16x16xf32>
    %cst_29 = arith.constant 1.772000e+00 : f32
    %29 = vector.broadcast %cst_29 : f32 to vector<16x16xf32>
    %30 = arith.mulf %29, %13 : vector<16x16xf32>
    %31 = arith.addf %7, %30 : vector<16x16xf32>
    %cst_30 = arith.constant 0.000000e+00 : f32
    %32 = vector.broadcast %cst_30 : f32 to vector<16x16xf32>
    %33 = arith.maximumf %32, %22 : vector<16x16xf32>
    %cst_31 = arith.constant 2.550000e+02 : f32
    %34 = vector.broadcast %cst_31 : f32 to vector<16x16xf32>
    %35 = arith.minimumf %34, %33 : vector<16x16xf32>
    %cst_32 = arith.constant 0.00392156886 : f32
    %36 = vector.broadcast %cst_32 : f32 to vector<16x16xf32>
    %37 = arith.mulf %35, %36 : vector<16x16xf32>
    %c0_33 = arith.constant 0 : index
    %c0_34 = arith.constant 0 : index
    %c0_35 = arith.constant 0 : index
    %c0_36 = arith.constant 0 : index
    %38 = vector.load %arg10[%c0_33, %c0_34, %c0_35, %c0_36] : memref<1x3x16x16xf32, #tpu.memory_space<vmem>>, vector<1x1x16x16xf32>
    %39 = vector.shape_cast %38 : vector<1x1x16x16xf32> to vector<16x16xf32>
    %40 = vector.shape_cast %37 : vector<16x16xf32> to vector<1x1x16x16xf32>
    tpu.vector_store %arg10[%c0_33, %c0_34, %c0_35, %c0_36], %40 {strides = array<i32>} : memref<1x3x16x16xf32, #tpu.memory_space<vmem>>, vector<1x1x16x16xf32>,
    %cst_37 = arith.constant 0.000000e+00 : f32
    %41 = vector.broadcast %cst_37 : f32 to vector<16x16xf32>
    %42 = arith.maximumf %41, %28 : vector<16x16xf32>
    %cst_38 = arith.constant 2.550000e+02 : f32
    %43 = vector.broadcast %cst_38 : f32 to vector<16x16xf32>
    %44 = arith.minimumf %43, %42 : vector<16x16xf32>
    %cst_39 = arith.constant 0.00392156886 : f32
    %45 = vector.broadcast %cst_39 : f32 to vector<16x16xf32>
    %46 = arith.mulf %44, %45 : vector<16x16xf32>
    %c0_40 = arith.constant 0 : index
    %c1 = arith.constant 1 : index
    %c0_41 = arith.constant 0 : index
    %c0_42 = arith.constant 0 : index
    %47 = vector.load %arg10[%c0_40, %c1, %c0_41, %c0_42] : memref<1x3x16x16xf32, #tpu.memory_space<vmem>>, vector<1x1x16x16xf32>
    %48 = vector.shape_cast %47 : vector<1x1x16x16xf32> to vector<16x16xf32>
    %49 = vector.shape_cast %46 : vector<16x16xf32> to vector<1x1x16x16xf32>
    tpu.vector_store %arg10[%c0_40, %c1, %c0_41, %c0_42], %49 {strides = array<i32>} : memref<1x3x16x16xf32, #tpu.memory_space<vmem>>, vector<1x1x16x16xf32>,
    %cst_43 = arith.constant 0.000000e+00 : f32
    %50 = vector.broadcast %cst_43 : f32 to vector<16x16xf32>
    %51 = arith.maximumf %50, %31 : vector<16x16xf32>
    %cst_44 = arith.constant 2.550000e+02 : f32
    %52 = vector.broadcast %cst_44 : f32 to vector<16x16xf32>
    %53 = arith.minimumf %52, %51 : vector<16x16xf32>
    %cst_45 = arith.constant 0.00392156886 : f32
    %54 = vector.broadcast %cst_45 : f32 to vector<16x16xf32>
    %55 = arith.mulf %53, %54 : vector<16x16xf32>
    %c0_46 = arith.constant 0 : index
    %c2 = arith.constant 2 : index
    %c0_47 = arith.constant 0 : index
    %c0_48 = arith.constant 0 : index
    %56 = vector.load %arg10[%c0_46, %c2, %c0_47, %c0_48] : memref<1x3x16x16xf32, #tpu.memory_space<vmem>>, vector<1x1x16x16xf32>
    %57 = vector.shape_cast %56 : vector<1x1x16x16xf32> to vector<16x16xf32>
    %58 = vector.shape_cast %55 : vector<16x16xf32> to vector<1x1x16x16xf32>
    tpu.vector_store %arg10[%c0_46, %c2, %c0_47, %c0_48], %58 {strides = array<i32>} : memref<1x3x16x16xf32, #tpu.memory_space<vmem>>, vector<1x1x16x16xf32>,
    return
  }
  func.func @transform_0(%arg0: i32, %arg1: i32, %arg2: i32) -> (i32, i32, i32) {
    %c0_i32 = arith.constant 0 : i32
    return %arg0, %arg1, %arg2 : i32, i32, i32
  }
  func.func @transform_1(%arg0: i32, %arg1: i32, %arg2: i32) -> (i32, i32, i32) {
    %c0_i32 = arith.constant 0 : i32
    return %arg0, %arg1, %arg2 : i32, i32, i32
  }
  func.func @transform_2(%arg0: i32, %arg1: i32, %arg2: i32) -> (i32, i32, i32) {
    %c0_i32 = arith.constant 0 : i32
    return %arg0, %arg1, %arg2 : i32, i32, i32
  }
  func.func @transform_3(%arg0: i32, %arg1: i32, %arg2: i32) -> (i32, i32) {
    %c0_i32 = arith.constant 0 : i32
    %c0_i32_0 = arith.constant 0 : i32
    %c0_i32_1 = arith.constant 0 : i32
    return %c0_i32, %c0_i32_0 : i32, i32
  }
  func.func @transform_4(%arg0: i32, %arg1: i32, %arg2: i32) -> (i32, i32) {
    %c0_i32 = arith.constant 0 : i32
    %c0_i32_0 = arith.constant 0 : i32
    %c0_i32_1 = arith.constant 0 : i32
    return %c0_i32, %c0_i32_0 : i32, i32
  }
  func.func @transform_5(%arg0: i32, %arg1: i32, %arg2: i32) -> (i32, i32) {
    %c0_i32 = arith.constant 0 : i32
    %c0_i32_0 = arith.constant 0 : i32
    %c0_i32_1 = arith.constant 0 : i32
    return %c0_i32, %c0_i32_0 : i32, i32
  }
  func.func @transform_6(%arg0: i32, %arg1: i32, %arg2: i32) -> (i32, i32) {
    %c0_i32 = arith.constant 0 : i32
    %c0_i32_0 = arith.constant 0 : i32
    %c0_i32_1 = arith.constant 0 : i32
    return %c0_i32, %c0_i32_0 : i32, i32
  }
  func.func @transform_7(%arg0: i32, %arg1: i32, %arg2: i32) -> (i32, i32, i32, i32) {
    %c0_i32 = arith.constant 0 : i32
    %c0_i32_0 = arith.constant 0 : i32
    return %arg0, %c0_i32, %arg1, %arg2 : i32, i32, i32, i32
  }
}

</mosaic_0001>

<llo_original>
// kernel: tpu_custom_call.1
$region0: #{tpu_custom_call.1}
  #allocation0 [shape = 'u32[]', space=smem, size = 0x4, offset = 0x4, fixed_abs, tag = 'smem constant byte address 0x4 - core index']
  #allocation1 [shape = 'u32[144,128]{1,0:T(1,128)}', space=vmem, size = 0x12000, scoped, tag = 'internal scratch']
  %s0 = inlined_call_operand.hbm [shape: f32[2,16,16], index: 0, kind: input, shape index: {}]
  %s1 = inlined_call_operand.vmem [shape: f32[2,8,8], index: 1, kind: input, shape index: {}]
  %s2 = inlined_call_operand.hbm [shape: f32[2,8,8], index: 2, kind: input, shape index: {}]
  %s3 = inlined_call_operand.hbm [shape: f32[16,16], index: 3, kind: input, shape index: {}]
  %s4 = inlined_call_operand.hbm [shape: f32[16,16], index: 4, kind: input, shape index: {}]
  %s5 = inlined_call_operand.vmem [shape: f32[16,8], index: 5, kind: input, shape index: {}]
  %s6 = inlined_call_operand.vmem [shape: f32[8,16], index: 6, kind: input, shape index: {}]
  %s7 = inlined_call_operand.hbm [shape: f32[2,3,16,16], index: 7, kind: output, shape index: {}]
  %s8 = sld [smem:[#allocation0]]
  $region77: #{tpu_custom_call.1} parent=0
    _
  %s10 = ssub.s32 1, %s8
  %s11 = scalar_select 0, %s10, %s8
  $region1: #{tpu_custom_call.1} parent=0
    #allocation2 [shape = 'u8[16384]{0}', space=vmem, size = 0x4000, scoped, tag = 'input window, operand 0']
    #allocation3 [shape = 's32[2]{0}', space=sflag, size = 0x8, scoped, tag = 'scoped memory for tpu_custom_call.1']
    #allocation4 [shape = 's32[2]{0}', space=sflag, size = 0x8, scoped, tag = 'scoped memory for tpu_custom_call.1']
    #allocation5 [shape = 'u8[8192]{0}', space=vmem, size = 0x2000, scoped, tag = 'input window, operand 2']
    #allocation6 [shape = 's32[2]{0}', space=sflag, size = 0x8, scoped, tag = 'scoped memory for tpu_custom_call.1']
    #allocation7 [shape = 'u8[8192]{0}', space=vmem, size = 0x2000, scoped, tag = 'input window, operand 3, single buffered']
    #allocation8 [shape = 'u8[8192]{0}', space=vmem, size = 0x2000, scoped, tag = 'input window, operand 4, single buffered']
    #allocation9 [shape = 's32[1]{0}', space=sflag, size = 0x4, scoped, tag = 'scoped memory for tpu_custom_call.1']
    #allocation10 [shape = 'u8[49152]{0}', space=vmem, size = 0xc000, scoped, tag = 'output window, operand 0']
    %12 = vsyncpa [#allocation3], 0
    %s13 = scalar_lea.sflag [#allocation3], 1
    %14 = vsyncpa %s13, 0
    %15 = vsyncpa [#allocation6], 0
    %s16 = scalar_lea.sflag [#allocation6], 1
    %17 = vsyncpa %s16, 0
    %18 = vsyncpa [#allocation9], 0
    %19 = vsyncpa [#allocation4], 0
    %s20 = scalar_lea.sflag [#allocation4], 1
    %21 = vsyncpa %s20, 0
    loop: start=0, step=1, limit=4
    $region2: #{tpu_custom_call.1} parent=1 // loop_pre_header
      _
    $region3: #{tpu_custom_call.1} parent=1 // loop_header
      %s23 = sphi 0, %s27
      %p24 = scmp.ge.s32.totalorder %s23, 4
      %s30 = sphi 0, %s49
      %s31 = sphi 0, %s45
      %s32 = sphi 0, %s41
      %s33 = sphi 0, %s30
      %s34 = sphi 0, %s31
      %s35 = sphi 0, %s32
      %s36 = sphi 0, %s33
      %s37 = sphi 0, %s34
      %s38 = sphi 0, %s35
      %s56 = sphi 0, %s58
      %s59 = sphi 0, %s56
      %s60 = sphi 0, %s59
      %s76 = sphi 0, %s60
      %s86 = sphi 0, %s88
      %s89 = sphi 0, %s86
      %s90 = sphi 0, %s89
      %s106 = sphi 0, %s90
      %s116 = sphi 0, %s118
      %s119 = sphi 0, %s116
      %s120 = sphi 0, %s119
      %s136 = sphi 0, %s120
      %s140 = sphi 0, %s140
      %s142 = sphi 0, %s140
      %s143 = sphi 0, %s142
      %s157 = sphi 0, %s143
      %s161 = sphi 0, %s161
      %s163 = sphi 0, %s161
      %s164 = sphi 0, %s163
      %s178 = sphi 0, %s164
      %s182 = sphi 0, %s182
      %s184 = sphi 0, %s182
      %s185 = sphi 0, %s184
      %s199 = sphi 0, %s185
      %s203 = sphi 0, %s203
      %s205 = sphi 0, %s203
      %s206 = sphi 0, %s205
      %s220 = sphi 0, %s206
      %s230 = sphi 0, %s232
      %s233 = sphi 0, %s230
      %s234 = sphi 0, %s233
      %s250 = sphi 0, %s234
    $region4: #{tpu_custom_call.1} parent=1 // loop_header_branch
      %26 = sbr.rel (%p24) target = $region8
    $region5: #{tpu_custom_call.1} parent=1 // loop_body
      %s28 = ssub.s32 %s23, 1
      %s29 = ssub.s32 %s23, 2
      %s39 = sadd.s32 1, %s32
      %p40 = scmp.ge.s32.totalorder %s39, 1
      %s41 = scalar_select %p40, 0, %s39
      %s42 = sadd.s32 1, %s31
      %s43 = scalar_select %p40, %s42, %s31
      %p44 = scmp.ge.s32.totalorder %s43, 1
      %s45 = scalar_select %p44, 0, %s43
      %s46 = sadd.s32 1, %s30
      %s47 = scalar_select %p44, %s46, %s30
      %p48 = scmp.ge.s32.totalorder %s47, 2
      %s49 = scalar_select %p48, 0, %s47
      %s50 = ssub.s32 %s30, %s49
      %s51 = ssub.s32 %s31, %s45
      %s52 = sor.u32 %s50, %s51
      %s53 = ssub.s32 %s32, %s41
      %s54 = sor.u32 %s52, %s53
      %p55 = scmp.eq.s32.totalorder %s54, 0
      %s57 = sadd.s32 %s56, 1
      %s58 = scalar_select %p55, %s56, %s57
      %p61 = pneg %p55
      %p62 = scmp.eq.s32.totalorder %s23, 1
      %p63 = por %p61, %p62
      %p64 = scmp.ne.s32.totalorder %s56, %s59
      %p65 = scmp.eq.s32.totalorder %s23, 0
      %p66 = por %p64, %p65
      %p67 = scmp.ne.s32.totalorder %s56, %s59
      %p68 = scmp.eq.s32.totalorder %s28, 1
      %p69 = por %p67, %p68
      %p70 = scmp.ne.s32.totalorder %s59, %s60
      %p71 = scmp.eq.s32.totalorder %s28, 0
      %p72 = por %p70, %p71
      %p73 = scmp.ne.s32.totalorder %s59, %s60
      %p74 = scmp.eq.s32.totalorder %s29, 1
      %p75 = por %p73, %p74
      %p77 = scmp.ne.s32.totalorder %s60, %s76
      %p78 = scmp.eq.s32.totalorder %s29, 0
      %p79 = por %p77, %p78
      %s80 = ssub.s32 %s30, %s49
      %s81 = ssub.s32 %s31, %s45
      %s82 = sor.u32 %s80, %s81
      %s83 = ssub.s32 %s32, %s41
      %s84 = sor.u32 %s82, %s83
      %p85 = scmp.eq.s32.totalorder %s84, 0
      %s87 = sadd.s32 %s86, 1
      %s88 = scalar_select %p85, %s86, %s87
      %p91 = pneg %p85
      %p92 = scmp.eq.s32.totalorder %s23, 1
      %p93 = por %p91, %p92
      %p94 = scmp.ne.s32.totalorder %s86, %s89
      %p95 = scmp.eq.s32.totalorder %s23, 0
      %p96 = por %p94, %p95
      %p97 = scmp.ne.s32.totalorder %s86, %s89
      %p98 = scmp.eq.s32.totalorder %s28, 1
      %p99 = por %p97, %p98
      %p100 = scmp.ne.s32.totalorder %s89, %s90
      %p101 = scmp.eq.s32.totalorder %s28, 0
      %p102 = por %p100, %p101
      %p103 = scmp.ne.s32.totalorder %s89, %s90
      %p104 = scmp.eq.s32.totalorder %s29, 1
      %p105 = por %p103, %p104
      %p107 = scmp.ne.s32.totalorder %s90, %s106
      %p108 = scmp.eq.s32.totalorder %s29, 0
      %p109 = por %p107, %p108
      %s110 = ssub.s32 %s30, %s49
      %s111 = ssub.s32 %s31, %s45
      %s112 = sor.u32 %s110, %s111
      %s113 = ssub.s32 %s32, %s41
      %s114 = sor.u32 %s112, %s113
      %p115 = scmp.eq.s32.totalorder %s114, 0
      %s117 = sadd.s32 %s116, 1
      %s118 = scalar_select %p115, %s116, %s117
      %p121 = pneg %p115
      %p122 = scmp.eq.s32.totalorder %s23, 1
      %p123 = por %p121, %p122
      %p124 = scmp.ne.s32.totalorder %s116, %s119
      %p125 = scmp.eq.s32.totalorder %s23, 0
      %p126 = por %p124, %p125
      %p127 = scmp.ne.s32.totalorder %s116, %s119
      %p128 = scmp.eq.s32.totalorder %s28, 1
      %p129 = por %p127, %p128
      %p130 = scmp.ne.s32.totalorder %s119, %s120
      %p131 = scmp.eq.s32.totalorder %s28, 0
      %p132 = por %p130, %p131
      %p133 = scmp.ne.s32.totalorder %s119, %s120
      %p134 = scmp.eq.s32.totalorder %s29, 1
      %p135 = por %p133, %p134
      %p137 = scmp.ne.s32.totalorder %s120, %s136
      %p138 = scmp.eq.s32.totalorder %s29, 0
      %p139 = por %p137, %p138
      %s141 = sadd.s32 %s140, 1
      %p144 = scmp.eq.s32.totalorder %s23, 1
      %p145 = scmp.ne.s32.totalorder %s140, %s142
      %p146 = scmp.eq.s32.totalorder %s23, 0
      %p147 = por %p145, %p146
      %p148 = scmp.ne.s32.totalorder %s140, %s142
      %p149 = scmp.eq.s32.totalorder %s28, 1
      %p150 = por %p148, %p149
      %p151 = scmp.ne.s32.totalorder %s142, %s143
      %p152 = scmp.eq.s32.totalorder %s28, 0
      %p153 = por %p151, %p152
      %p154 = scmp.ne.s32.totalorder %s142, %s143
      %p155 = scmp.eq.s32.totalorder %s29, 1
      %p156 = por %p154, %p155
      %p158 = scmp.ne.s32.totalorder %s143, %s157
      %p159 = scmp.eq.s32.totalorder %s29, 0
      %p160 = por %p158, %p159
      %s162 = sadd.s32 %s161, 1
      %p165 = scmp.eq.s32.totalorder %s23, 1
      %p166 = scmp.ne.s32.totalorder %s161, %s163
      %p167 = scmp.eq.s32.totalorder %s23, 0
      %p168 = por %p166, %p167
      %p169 = scmp.ne.s32.totalorder %s161, %s163
      %p170 = scmp.eq.s32.totalorder %s28, 1
      %p171 = por %p169, %p170
      %p172 = scmp.ne.s32.totalorder %s163, %s164
      %p173 = scmp.eq.s32.totalorder %s28, 0
      %p174 = por %p172, %p173
      %p175 = scmp.ne.s32.totalorder %s163, %s164
      %p176 = scmp.eq.s32.totalorder %s29, 1
      %p177 = por %p175, %p176
      %p179 = scmp.ne.s32.totalorder %s164, %s178
      %p180 = scmp.eq.s32.totalorder %s29, 0
      %p181 = por %p179, %p180
      %s183 = sadd.s32 %s182, 1
      %p186 = scmp.eq.s32.totalorder %s23, 1
      %p187 = scmp.ne.s32.totalorder %s182, %s184
      %p188 = scmp.eq.s32.totalorder %s23, 0
      %p189 = por %p187, %p188
      %p190 = scmp.ne.s32.totalorder %s182, %s184
      %p191 = scmp.eq.s32.totalorder %s28, 1
      %p192 = por %p190, %p191
      %p193 = scmp.ne.s32.totalorder %s184, %s185
      %p194 = scmp.eq.s32.totalorder %s28, 0
      %p195 = por %p193, %p194
      %p196 = scmp.ne.s32.totalorder %s184, %s185
      %p197 = scmp.eq.s32.totalorder %s29, 1
      %p198 = por %p196, %p197
      %p200 = scmp.ne.s32.totalorder %s185, %s199
      %p201 = scmp.eq.s32.totalorder %s29, 0
      %p202 = por %p200, %p201
      %s204 = sadd.s32 %s203, 1
      %p207 = scmp.eq.s32.totalorder %s23, 1
      %p208 = scmp.ne.s32.totalorder %s203, %s205
      %p209 = scmp.eq.s32.totalorder %s23, 0
      %p210 = por %p208, %p209
      %p211 = scmp.ne.s32.totalorder %s203, %s205
      %p212 = scmp.eq.s32.totalorder %s28, 1
      %p213 = por %p211, %p212
      %p214 = scmp.ne.s32.totalorder %s205, %s206
      %p215 = scmp.eq.s32.totalorder %s28, 0
      %p216 = por %p214, %p215
      %p217 = scmp.ne.s32.totalorder %s205, %s206
      %p218 = scmp.eq.s32.totalorder %s29, 1
      %p219 = por %p217, %p218
      %p221 = scmp.ne.s32.totalorder %s206, %s220
      %p222 = scmp.eq.s32.totalorder %s29, 0
      %p223 = por %p221, %p222
      %s224 = ssub.s32 %s30, %s49
      %s225 = ssub.s32 %s31, %s45
      %s226 = sor.u32 %s224, %s225
      %s227 = ssub.s32 %s32, %s41
      %s228 = sor.u32 %s226, %s227
      %p229 = scmp.eq.s32.totalorder %s228, 0
      %s231 = sadd.s32 %s230, 1
      %s232 = scalar_select %p229, %s230, %s231
      %p235 = pneg %p229
      %p236 = scmp.eq.s32.totalorder %s23, 1
      %p237 = por %p235, %p236
      %p238 = scmp.ne.s32.totalorder %s230, %s233
      %p239 = scmp.eq.s32.totalorder %s23, 0
      %p240 = por %p238, %p239
      %p241 = scmp.ne.s32.totalorder %s230, %s233
      %p242 = scmp.eq.s32.totalorder %s28, 1
      %p243 = por %p241, %p242
      %p244 = scmp.ne.s32.totalorder %s233, %s234
      %p245 = scmp.eq.s32.totalorder %s28, 0
      %p246 = por %p244, %p245
      %p247 = scmp.ne.s32.totalorder %s233, %s234
      %p248 = scmp.eq.s32.totalorder %s29, 1
      %p249 = por %p247, %p248
      %p251 = scmp.ne.s32.totalorder %s234, %s250
      %p252 = scmp.eq.s32.totalorder %s29, 0
      %p253 = por %p251, %p252
      %p254 = scmp.le.s32.totalorder 1, %s23
      %p255 = scmp.lt.s32.totalorder %s23, 3
      %p256 = pnand %p254, %p255
      %p257 = pneg %p256
      // Predicated region
      $region9: #{tpu_custom_call.1} parent=5 // pred_check
        _
      $region10: #{tpu_custom_call.1} parent=5 // pred_check_branch
        %259 = sbr.rel (%p256) target = $region12
      $region11: #{tpu_custom_call.1} parent=5 // pred_region
        %s260 = ssub.s32 %s23, 1
        // Predicated region
        $region13: #{tpu_custom_call.1} parent=11 // pred_check
          %p261 = pneg %p153
        $region14: #{tpu_custom_call.1} parent=11 // pred_check_branch
          %263 = sbr.rel (%p261) target = $region16
        $region15: #{tpu_custom_call.1} parent=11 // pred_region
          %s265 = ssub.s32 256, 256
          %266 = vsyncadd [#allocation6], %s265
          %s267 = sshll.u32 [#allocation7], 4
          %s268 = int_to_ptr.vmem [resolvable:$true] %s267
          %273 = dma.hbm_to_vmem [thread:$0]  %s3, 256, %s268, [#allocation6], 128, 128, 8
        $region16: #{tpu_custom_call.1} parent=11 // pred_fallthru
          _
        // Predicated region
        $region17: #{tpu_custom_call.1} parent=11 // pred_check
          %p274 = pneg %p174
        $region18: #{tpu_custom_call.1} parent=11 // pred_check_branch
          %276 = sbr.rel (%p274) target = $region20
        $region19: #{tpu_custom_call.1} parent=11 // pred_region
          %s278 = ssub.s32 256, 256
          %279 = vsyncadd [#allocation9], %s278
          %s280 = sshll.u32 [#allocation8], 4
          %s281 = int_to_ptr.vmem [resolvable:$true] %s280
          %286 = dma.hbm_to_vmem [thread:$0]  %s4, 256, %s281, [#allocation9], 128, 128, 8
        $region20: #{tpu_custom_call.1} parent=11 // pred_fallthru
          _
        // Predicated region
        $region21: #{tpu_custom_call.1} parent=11 // pred_check
          %p287 = pneg %p195
        $region22: #{tpu_custom_call.1} parent=11 // pred_check_branch
          %289 = sbr.rel (%p287) target = $region24
        $region23: #{tpu_custom_call.1} parent=11 // pred_region
          _
        $region24: #{tpu_custom_call.1} parent=11 // pred_fallthru
          _
        // Predicated region
        $region25: #{tpu_custom_call.1} parent=11 // pred_check
          %p290 = pneg %p216
        $region26: #{tpu_custom_call.1} parent=11 // pred_check_branch
          %292 = sbr.rel (%p290) target = $region28
        $region27: #{tpu_custom_call.1} parent=11 // pred_region
          _
        $region28: #{tpu_custom_call.1} parent=11 // pred_fallthru
          _
      $region12: #{tpu_custom_call.1} parent=5 // pred_fallthru
        _
      %p293 = scmp.lt.s32.totalorder %s23, 2
      // Predicated region
      $region29: #{tpu_custom_call.1} parent=5 // pred_check
        %p294 = pneg %p293
      $region30: #{tpu_custom_call.1} parent=5 // pred_check_branch
        %296 = sbr.rel (%p294) target = $region32
      $region31: #{tpu_custom_call.1} parent=5 // pred_region
        // Predicated region
        $region33: #{tpu_custom_call.1} parent=31 // pred_check
          %p297 = pneg %p66
        $region34: #{tpu_custom_call.1} parent=31 // pred_check_branch
          %299 = sbr.rel (%p297) target = $region36
        $region35: #{tpu_custom_call.1} parent=31 // pred_region
          %s300 = sand.u32 %s56, 1
          %s301 = scalar_lea.sflag [#allocation3], %s300
          %s302 = sand.u32 %s56, 1
          %s303 = smul.addr %s302, 16
          %s304 = scalar_lea.vmem [#allocation2], %s303
          %s305 = smul.u32 2, %s31
          %s307 = ssub.s32 256, 256
          %308 = vsyncadd %s301, %s307
          %s309 = sadd.s32 %s32, %s305
          %s310 = smul.addr %s30, 2
          %s311 = sadd.s32 %s309, %s310
          %s312 = smul.addr %s311, 128
          %s313 = scalar_lea.hbm %s0, %s312
          %s314 = sshll.u32 %s304, 4
          %s315 = int_to_ptr.vmem [resolvable:$true] %s314
          %320 = dma.hbm_to_vmem [thread:$0]  %s313, 256, %s315, %s301, 128, 128, 8
        $region36: #{tpu_custom_call.1} parent=31 // pred_fallthru
          _
        // Predicated region
        $region37: #{tpu_custom_call.1} parent=31 // pred_check
          %p321 = pneg %p96
        $region38: #{tpu_custom_call.1} parent=31 // pred_check_branch
          %323 = sbr.rel (%p321) target = $region40
        $region39: #{tpu_custom_call.1} parent=31 // pred_region
          %p324 = scmp.lt.s32.totalorder %s30, 1
          %s325 = scalar_select %p324, %s30, 1
          %p326 = scmp.lt.s32.totalorder %s31, 0
          %s327 = scalar_select %p326, %s31, 0
          %p328 = scmp.lt.s32.totalorder %s32, 0
          %s329 = scalar_select %p328, %s32, 0
          %s330 = sadd.s32 %s329, %s327
          %s331 = sadd.s32 %s330, %s325
          %s332 = smul.addr %s331, 8
          %s333 = scalar_lea.vmem %s1, %s332
        $region40: #{tpu_custom_call.1} parent=31 // pred_fallthru
          _
        // Predicated region
        $region41: #{tpu_custom_call.1} parent=31 // pred_check
          %p334 = pneg %p126
        $region42: #{tpu_custom_call.1} parent=31 // pred_check_branch
          %336 = sbr.rel (%p334) target = $region44
        $region43: #{tpu_custom_call.1} parent=31 // pred_region
          %s337 = sand.u32 %s23, 1
          %s338 = scalar_lea.sflag [#allocation6], %s337
          %s339 = sand.u32 %s116, 1
          %s340 = smul.addr %s339, 8
          %s341 = scalar_lea.vmem [#allocation5], %s340
          %s343 = ssub.s32 128, 128
          %344 = vsyncadd %s338, %s343
          %s345 = sadd.s32 %s32, %s31
          %s346 = sadd.s32 %s345, %s30
          %s347 = smul.addr %s346, 128
          %s348 = scalar_lea.hbm %s2, %s347
          %s350 = sshll.u32 %s341, 4
          %s351 = int_to_ptr.vmem [resolvable:$true] %s350
          %353 = dma.hbm_to_vmem [thread:$0]  %s348, 128, %s351, %s338
        $region44: #{tpu_custom_call.1} parent=31 // pred_fallthru
          _
      $region32: #{tpu_custom_call.1} parent=5 // pred_fallthru
        _
      %p354 = scmp.le.s32.totalorder 1, %s23
      %p355 = scmp.lt.s32.totalorder %s23, 3
      %p356 = pnand %p354, %p355
      %p357 = pneg %p356
      // Predicated region
      $region45: #{tpu_custom_call.1} parent=5 // pred_check
        _
      $region46: #{tpu_custom_call.1} parent=5 // pred_check_branch
        %359 = sbr.rel (%p356) target = $region48
      $region47: #{tpu_custom_call.1} parent=5 // pred_region
        %s360 = ssub.s32 %s23, 1
        %s361 = sand.u32 %s59, 1
        %s362 = scalar_lea.sflag [#allocation3], %s361
        %s363 = sand.u32 %s59, 1
        %s364 = smul.addr %s363, 16
        %s365 = scalar_lea.vmem [#allocation2], %s364
        // Predicated region
        $region49: #{tpu_custom_call.1} parent=47 // pred_check
          %p366 = pneg %p72
        $region50: #{tpu_custom_call.1} parent=47 // pred_check_branch
          %368 = sbr.rel (%p366) target = $region52
        $region51: #{tpu_custom_call.1} parent=47 // pred_region
          %369 = dma.done %s362, 256
        $region52: #{tpu_custom_call.1} parent=47 // pred_fallthru
          _
        %s370 = sand.u32 %s28, 1
        %s371 = scalar_lea.sflag [#allocation6], %s370
        %s372 = sand.u32 %s119, 1
        %s373 = smul.addr %s372, 8
        %s374 = scalar_lea.vmem [#allocation5], %s373
        // Predicated region
        $region53: #{tpu_custom_call.1} parent=47 // pred_check
          %p375 = pneg %p132
        $region54: #{tpu_custom_call.1} parent=47 // pred_check_branch
          %377 = sbr.rel (%p375) target = $region56
        $region55: #{tpu_custom_call.1} parent=47 // pred_region
          %378 = dma.done %s371, 128
        $region56: #{tpu_custom_call.1} parent=47 // pred_fallthru
          _
        // Predicated region
        $region57: #{tpu_custom_call.1} parent=47 // pred_check
          %p379 = pneg %p153
        $region58: #{tpu_custom_call.1} parent=47 // pred_check_branch
          %381 = sbr.rel (%p379) target = $region60
        $region59: #{tpu_custom_call.1} parent=47 // pred_region
          %382 = dma.done [#allocation6], 256
        $region60: #{tpu_custom_call.1} parent=47 // pred_fallthru
          _
        // Predicated region
        $region61: #{tpu_custom_call.1} parent=47 // pred_check
          %p383 = pneg %p174
        $region62: #{tpu_custom_call.1} parent=47 // pred_check_branch
          %385 = sbr.rel (%p383) target = $region64
        $region63: #{tpu_custom_call.1} parent=47 // pred_region
          %386 = dma.done [#allocation9], 256
        $region64: #{tpu_custom_call.1} parent=47 // pred_fallthru
          _
        %s387 = sand.u32 %s59, 1
        %s388 = scalar_lea.sflag [#allocation3], %s387
        %s389 = sand.u32 %s59, 1
        %s390 = smul.addr %s389, 16
        %s391 = scalar_lea.vmem [#allocation2], %s390
        %p392 = pneg %p72
        %p393 = pneg %p69
        %p394 = scmp.lt.s32.totalorder %s33, 1
        %s395 = scalar_select %p394, %s33, 1
        %p396 = scmp.lt.s32.totalorder %s34, 0
        %s397 = scalar_select %p396, %s34, 0
        %p398 = scmp.lt.s32.totalorder %s35, 0
        %s399 = scalar_select %p398, %s35, 0
        %s400 = sadd.s32 %s399, %s397
        %s401 = sadd.s32 %s400, %s395
        %s402 = smul.addr %s401, 8
        %s403 = scalar_lea.vmem %s1, %s402
        %p404 = pneg %p102
        %p405 = pneg %p99
        %s406 = sand.u32 %s28, 1
        %s407 = scalar_lea.sflag [#allocation6], %s406
        %s408 = sand.u32 %s119, 1
        %s409 = smul.addr %s408, 8
        %s410 = scalar_lea.vmem [#allocation5], %s409
        %p411 = pneg %p132
        %p412 = pneg %p129
        %p413 = pneg %p153
        %p414 = pneg %p150
        %p415 = pneg %p174
        %p416 = pneg %p171
        %p417 = pneg %p195
        %p418 = pneg %p192
        %p419 = pneg %p216
        %p420 = pneg %p213
        %p421 = pneg %p246
        %p422 = pneg %p243
        %s423 = sand.u32 %s233, 1
        %s424 = scalar_lea.sflag [#allocation4], %s423
        %s425 = sand.u32 %s233, 1
        %s426 = smul.addr %s425, 48
        %s427 = scalar_lea.vmem [#allocation10], %s426
        %s428 = smul.u32 2, %s34
        %p429 = scmp.lt.s32.totalorder %s33, 1
        %s430 = scalar_select %p429, %s33, 1
        %p431 = scmp.lt.s32.totalorder %s34, 0
        %s432 = scalar_select %p431, %s34, 0
        %p433 = scmp.lt.s32.totalorder %s35, 0
        %s434 = scalar_select %p433, %s35, 0
        %s435 = sadd.s32 %s434, %s432
        %s436 = sadd.s32 %s435, %s430
        %s437 = smul.addr %s436, 8
        %s438 = scalar_lea.vmem %s1, %s437
        %s439 = smul.u32 2, %s34
        %v440 = vld [vmem:[#allocation7] sm:$0xff]
        %v441 = vld [vmem:[#allocation7 + $0x8] sm:$0xff]
        %v442 = vld [vmem:[%s365] sm:$0xff]
        %v443 = vld [vmem:[%s365 + $0x8] sm:$0xff]
        %vm444 = vcmask 130048
        %v446 = vsel %vm444, %v440, 0
        %v449 = vsel %vm444, %v441, 0
        %451 = vmatprep.subr.mxu0 0.0
        %452 = vmatpush1.msra.mxu0 0.0
        %453 = vmatprep.subr.mxu0 0.0
        %454 = vmatpush1.msra.mxu0 0.0
        %455 = vmatprep.subr.mxu0 0.0
        %456 = vmatpush1.msra.mxu0 0.0
        %457 = vmatprep.subr.mxu0 0.0
        %458 = vmatpush1.msra.mxu0 0.0
        %459 = vmatprep.subr.mxu0 0.0
        %460 = vmatpush1.msra.mxu0 0.0
        %461 = vmatprep.subr.mxu0 0.0
        %462 = vmatpush1.msra.mxu0 0.0
        %463 = vmatprep.subr.mxu0 0.0
        %464 = vmatpush1.msra.mxu0 0.0
        %465 = vmatprep.subr.mxu0 0.0
        %466 = vmatpush1.msra.mxu0 0.0
        %467 = vmatprep.subr.mxu0 0.0
        %468 = vmatpush1.msra.mxu0 0.0
        %469 = vmatprep.subr.mxu0 0.0
        %470 = vmatpush1.msra.mxu0 0.0
        %471 = vmatprep.subr.mxu0 0.0
        %472 = vmatpush1.msra.mxu0 0.0
        %473 = vmatprep.subr.mxu0 0.0
        %474 = vmatpush1.msra.mxu0 0.0
        %475 = vmatprep.subr.mxu0 0.0
        %476 = vmatpush1.msra.mxu0 0.0
        %477 = vmatprep.subr.mxu0 0.0
        %478 = vmatpush1.msra.mxu0 0.0
        %479 = vmatprep.subr.mxu0 0.0
        %480 = vmatpush1.msra.mxu0 %v443
        %481 = vmatprep.subr.mxu0 0.0
        %482 = vmatpush1.msra.mxu0 %v442
        %483 = vmatprep.subr.mxu0 0.0
        %484 = vmatpush2.msra.mxu0 0.0
        %485 = vmatprep.subr.mxu0 0.0
        %486 = vmatpush2.msra.mxu0 0.0
        %487 = vmatprep.subr.mxu0 0.0
        %488 = vmatpush2.msra.mxu0 0.0
        %489 = vmatprep.subr.mxu0 0.0
        %490 = vmatpush2.msra.mxu0 0.0
        %491 = vmatprep.subr.mxu0 0.0
        %492 = vmatpush2.msra.mxu0 0.0
        %493 = vmatprep.subr.mxu0 0.0
        %494 = vmatpush2.msra.mxu0 0.0
        %495 = vmatprep.subr.mxu0 0.0
        %496 = vmatpush2.msra.mxu0 0.0
        %497 = vmatprep.subr.mxu0 0.0
        %498 = vmatpush2.msra.mxu0 0.0
        %499 = vmatprep.subr.mxu0 0.0
        %500 = vmatpush2.msra.mxu0 0.0
        %501 = vmatprep.subr.mxu0 0.0
        %502 = vmatpush2.msra.mxu0 0.0
        %503 = vmatprep.subr.mxu0 0.0
        %504 = vmatpush2.msra.mxu0 0.0
        %505 = vmatprep.subr.mxu0 0.0
        %506 = vmatpush2.msra.mxu0 0.0
        %507 = vmatprep.subr.mxu0 0.0
        %508 = vmatpush2.msra.mxu0 0.0
        %509 = vmatprep.subr.mxu0 0.0
        %510 = vmatpush2.msra.mxu0 0.0
        %511 = vmatprep.subr.mxu0 0.0
        %512 = vmatpush2.msra.mxu0 0.0
        %513 = vmatprep.subr.mxu0 0.0
        %514 = vmatpush2.msra.mxu0 0.0
        %515 = vmatprep.mubr.f32.mxu0 0.0
        %516 = vmatmul.mubr.f32.gmra.mxu0 %v446
        %v517 = vpop.f32.mrf.mxu0
        %v518 = vadd.f32 0.0, %v517
        %v519 = vpop.f32.mrf.mxu0
        %520 = vmatprep.mubr.f32.mxu0 0.0
        %521 = vmatmul.mubr.f32.gmra.mxu0 %v449
        %v522 = vpop.f32.mrf.mxu0
        %v523 = vadd.f32 0.0, %v522
        %v524 = vpop.f32.mrf.mxu0
        %525 = vdwg.mxu0
        %v526 = vld [vmem:[#allocation8] sm:$0xff]
        %v527 = vld [vmem:[#allocation8 + $0x8] sm:$0xff]
        %v529 = vsel %vm444, %v518, 0
        %v532 = vsel %vm444, %v523, 0
        %534 = vmatprep.subr.mxu0 0.0
        %535 = vmatpush1.msra.mxu0 0.0
        %536 = vmatprep.subr.mxu0 0.0
        %537 = vmatpush1.msra.mxu0 0.0
        %538 = vmatprep.subr.mxu0 0.0
        %539 = vmatpush1.msra.mxu0 0.0
        %540 = vmatprep.subr.mxu0 0.0
        %541 = vmatpush1.msra.mxu0 0.0
        %542 = vmatprep.subr.mxu0 0.0
        %543 = vmatpush1.msra.mxu0 0.0
        %544 = vmatprep.subr.mxu0 0.0
        %545 = vmatpush1.msra.mxu0 0.0
        %546 = vmatprep.subr.mxu0 0.0
        %547 = vmatpush1.msra.mxu0 0.0
        %548 = vmatprep.subr.mxu0 0.0
        %549 = vmatpush1.msra.mxu0 0.0
        %550 = vmatprep.subr.mxu0 0.0
        %551 = vmatpush1.msra.mxu0 0.0
        %552 = vmatprep.subr.mxu0 0.0
        %553 = vmatpush1.msra.mxu0 0.0
        %554 = vmatprep.subr.mxu0 0.0
        %555 = vmatpush1.msra.mxu0 0.0
        %556 = vmatprep.subr.mxu0 0.0
        %557 = vmatpush1.msra.mxu0 0.0
        %558 = vmatprep.subr.mxu0 0.0
        %559 = vmatpush1.msra.mxu0 0.0
        %560 = vmatprep.subr.mxu0 0.0
        %561 = vmatpush1.msra.mxu0 0.0
        %562 = vmatprep.subr.mxu0 0.0
        %563 = vmatpush1.msra.mxu0 %v527
        %564 = vmatprep.subr.mxu0 0.0
        %565 = vmatpush1.msra.mxu0 %v526
        %566 = vmatprep.subr.mxu0 0.0
        %567 = vmatpush2.msra.mxu0 0.0
        %568 = vmatprep.subr.mxu0 0.0
        %569 = vmatpush2.msra.mxu0 0.0
        %570 = vmatprep.subr.mxu0 0.0
        %571 = vmatpush2.msra.mxu0 0.0
        %572 = vmatprep.subr.mxu0 0.0
        %573 = vmatpush2.msra.mxu0 0.0
        %574 = vmatprep.subr.mxu0 0.0
        %575 = vmatpush2.msra.mxu0 0.0
        %576 = vmatprep.subr.mxu0 0.0
        %577 = vmatpush2.msra.mxu0 0.0
        %578 = vmatprep.subr.mxu0 0.0
        %579 = vmatpush2.msra.mxu0 0.0
        %580 = vmatprep.subr.mxu0 0.0
        %581 = vmatpush2.msra.mxu0 0.0
        %582 = vmatprep.subr.mxu0 0.0
        %583 = vmatpush2.msra.mxu0 0.0
        %584 = vmatprep.subr.mxu0 0.0
        %585 = vmatpush2.msra.mxu0 0.0
        %586 = vmatprep.subr.mxu0 0.0
        %587 = vmatpush2.msra.mxu0 0.0
        %588 = vmatprep.subr.mxu0 0.0
        %589 = vmatpush2.msra.mxu0 0.0
        %590 = vmatprep.subr.mxu0 0.0
        %591 = vmatpush2.msra.mxu0 0.0
        %592 = vmatprep.subr.mxu0 0.0
        %593 = vmatpush2.msra.mxu0 0.0
        %594 = vmatprep.subr.mxu0 0.0
        %595 = vmatpush2.msra.mxu0 0.0
        %596 = vmatprep.subr.mxu0 0.0
        %597 = vmatpush2.msra.mxu0 0.0
        %598 = vmatprep.mubr.f32.mxu0 0.0
        %599 = vmatmul.mubr.f32.gmra.mxu0 %v529
        %v600 = vpop.f32.mrf.mxu0
        %v601 = vadd.f32 128.0, %v600
        %v602 = vpop.f32.mrf.mxu0
        %603 = vmatprep.mubr.f32.mxu0 0.0
        %604 = vmatmul.mubr.f32.gmra.mxu0 %v532
        %v605 = vpop.f32.mrf.mxu0
        %v606 = vadd.f32 128.0, %v605
        %v607 = vpop.f32.mrf.mxu0
        %608 = vdwg.mxu0
        %v609 = vld [vmem:[%s5] sm:$0xff]
        %v610 = vld [vmem:[%s5 + $0x8] sm:$0xff]
        %v611 = vld [vmem:[%s438] sm:$0xff]
        %vm612 = vcmask 64512
        %v614 = vsel %vm612, %v609, 0
        %v617 = vsel %vm612, %v610, 0
        %619 = vmatprep.subr.mxu0 0.0
        %620 = vmatpush1.msra.mxu0 0.0
        %621 = vmatprep.subr.mxu0 0.0
        %622 = vmatpush1.msra.mxu0 0.0
        %623 = vmatprep.subr.mxu0 0.0
        %624 = vmatpush1.msra.mxu0 0.0
        %625 = vmatprep.subr.mxu0 0.0
        %626 = vmatpush1.msra.mxu0 0.0
        %627 = vmatprep.subr.mxu0 0.0
        %628 = vmatpush1.msra.mxu0 0.0
        %629 = vmatprep.subr.mxu0 0.0
        %630 = vmatpush1.msra.mxu0 0.0
        %631 = vmatprep.subr.mxu0 0.0
        %632 = vmatpush1.msra.mxu0 0.0
        %633 = vmatprep.subr.mxu0 0.0
        %634 = vmatpush1.msra.mxu0 0.0
        %635 = vmatprep.subr.mxu0 0.0
        %636 = vmatpush1.msra.mxu0 0.0
        %637 = vmatprep.subr.mxu0 0.0
        %638 = vmatpush1.msra.mxu0 0.0
        %639 = vmatprep.subr.mxu0 0.0
        %640 = vmatpush1.msra.mxu0 0.0
        %641 = vmatprep.subr.mxu0 0.0
        %642 = vmatpush1.msra.mxu0 0.0
        %643 = vmatprep.subr.mxu0 0.0
        %644 = vmatpush1.msra.mxu0 0.0
        %645 = vmatprep.subr.mxu0 0.0
        %646 = vmatpush1.msra.mxu0 0.0
        %647 = vmatprep.subr.mxu0 0.0
        %648 = vmatpush1.msra.mxu0 0.0
        %649 = vmatprep.subr.mxu0 0.0
        %650 = vmatpush1.msra.mxu0 %v611
        %651 = vmatprep.subr.mxu0 0.0
        %652 = vmatpush2.msra.mxu0 0.0
        %653 = vmatprep.subr.mxu0 0.0
        %654 = vmatpush2.msra.mxu0 0.0
        %655 = vmatprep.subr.mxu0 0.0
        %656 = vmatpush2.msra.mxu0 0.0
        %657 = vmatprep.subr.mxu0 0.0
        %658 = vmatpush2.msra.mxu0 0.0
        %659 = vmatprep.subr.mxu0 0.0
        %660 = vmatpush2.msra.mxu0 0.0
        %661 = vmatprep.subr.mxu0 0.0
        %662 = vmatpush2.msra.mxu0 0.0
        %663 = vmatprep.subr.mxu0 0.0
        %664 = vmatpush2.msra.mxu0 0.0
        %665 = vmatprep.subr.mxu0 0.0
        %666 = vmatpush2.msra.mxu0 0.0
        %667 = vmatprep.subr.mxu0 0.0
        %668 = vmatpush2.msra.mxu0 0.0
        %669 = vmatprep.subr.mxu0 0.0
        %670 = vmatpush2.msra.mxu0 0.0
        %671 = vmatprep.subr.mxu0 0.0
        %672 = vmatpush2.msra.mxu0 0.0
        %673 = vmatprep.subr.mxu0 0.0
        %674 = vmatpush2.msra.mxu0 0.0
        %675 = vmatprep.subr.mxu0 0.0
        %676 = vmatpush2.msra.mxu0 0.0
        %677 = vmatprep.subr.mxu0 0.0
        %678 = vmatpush2.msra.mxu0 0.0
        %679 = vmatprep.subr.mxu0 0.0
        %680 = vmatpush2.msra.mxu0 0.0
        %681 = vmatprep.subr.mxu0 0.0
        %682 = vmatpush2.msra.mxu0 0.0
        %683 = vmatprep.mubr.f32.mxu0 0.0
        %684 = vmatmul.mubr.f32.gmra.mxu0 %v614
        %v685 = vpop.f32.mrf.mxu0
        %v686 = vadd.f32 0.0, %v685
        %v687 = vpop.f32.mrf.mxu0
        %688 = vmatprep.mubr.f32.mxu0 0.0
        %689 = vmatmul.mubr.f32.gmra.mxu0 %v617
        %v690 = vpop.f32.mrf.mxu0
        %v691 = vadd.f32 0.0, %v690
        %v692 = vpop.f32.mrf.mxu0
        %693 = vdwg.mxu0
        %v694 = vld [vmem:[%s6] sm:$0xff]
        %v696 = vsel %vm612, %v686, 0
        %v699 = vsel %vm612, %v691, 0
        %701 = vmatprep.subr.mxu0 0.0
        %702 = vmatpush1.msra.mxu0 0.0
        %703 = vmatprep.subr.mxu0 0.0
        %704 = vmatpush1.msra.mxu0 0.0
        %705 = vmatprep.subr.mxu0 0.0
        %706 = vmatpush1.msra.mxu0 0.0
        %707 = vmatprep.subr.mxu0 0.0
        %708 = vmatpush1.msra.mxu0 0.0
        %709 = vmatprep.subr.mxu0 0.0
        %710 = vmatpush1.msra.mxu0 0.0
        %711 = vmatprep.subr.mxu0 0.0
        %712 = vmatpush1.msra.mxu0 0.0
        %713 = vmatprep.subr.mxu0 0.0
        %714 = vmatpush1.msra.mxu0 0.0
        %715 = vmatprep.subr.mxu0 0.0
        %716 = vmatpush1.msra.mxu0 0.0
        %717 = vmatprep.subr.mxu0 0.0
        %718 = vmatpush1.msra.mxu0 0.0
        %719 = vmatprep.subr.mxu0 0.0
        %720 = vmatpush1.msra.mxu0 0.0
        %721 = vmatprep.subr.mxu0 0.0
        %722 = vmatpush1.msra.mxu0 0.0
        %723 = vmatprep.subr.mxu0 0.0
        %724 = vmatpush1.msra.mxu0 0.0
        %725 = vmatprep.subr.mxu0 0.0
        %726 = vmatpush1.msra.mxu0 0.0
        %727 = vmatprep.subr.mxu0 0.0
        %728 = vmatpush1.msra.mxu0 0.0
        %729 = vmatprep.subr.mxu0 0.0
        %730 = vmatpush1.msra.mxu0 0.0
        %731 = vmatprep.subr.mxu0 0.0
        %732 = vmatpush1.msra.mxu0 %v694
        %733 = vmatprep.subr.mxu0 0.0
        %734 = vmatpush2.msra.mxu0 0.0
        %735 = vmatprep.subr.mxu0 0.0
        %736 = vmatpush2.msra.mxu0 0.0
        %737 = vmatprep.subr.mxu0 0.0
        %738 = vmatpush2.msra.mxu0 0.0
        %739 = vmatprep.subr.mxu0 0.0
        %740 = vmatpush2.msra.mxu0 0.0
        %741 = vmatprep.subr.mxu0 0.0
        %742 = vmatpush2.msra.mxu0 0.0
        %743 = vmatprep.subr.mxu0 0.0
        %744 = vmatpush2.msra.mxu0 0.0
        %745 = vmatprep.subr.mxu0 0.0
        %746 = vmatpush2.msra.mxu0 0.0
        %747 = vmatprep.subr.mxu0 0.0
        %748 = vmatpush2.msra.mxu0 0.0
        %749 = vmatprep.subr.mxu0 0.0
        %750 = vmatpush2.msra.mxu0 0.0
        %751 = vmatprep.subr.mxu0 0.0
        %752 = vmatpush2.msra.mxu0 0.0
        %753 = vmatprep.subr.mxu0 0.0
        %754 = vmatpush2.msra.mxu0 0.0
        %755 = vmatprep.subr.mxu0 0.0
        %756 = vmatpush2.msra.mxu0 0.0
        %757 = vmatprep.subr.mxu0 0.0
        %758 = vmatpush2.msra.mxu0 0.0
        %759 = vmatprep.subr.mxu0 0.0
        %760 = vmatpush2.msra.mxu0 0.0
        %761 = vmatprep.subr.mxu0 0.0
        %762 = vmatpush2.msra.mxu0 0.0
        %763 = vmatprep.subr.mxu0 0.0
        %764 = vmatpush2.msra.mxu0 0.0
        %765 = vmatprep.mubr.f32.mxu0 0.0
        %766 = vmatmul.mubr.f32.gmra.mxu0 %v696
        %v767 = vpop.f32.mrf.mxu0
        %v768 = vadd.f32 0.0, %v767
        %v769 = vpop.f32.mrf.mxu0
        %770 = vmatprep.mubr.f32.mxu0 0.0
        %771 = vmatmul.mubr.f32.gmra.mxu0 %v699
        %v772 = vpop.f32.mrf.mxu0
        %v773 = vadd.f32 0.0, %v772
        %v774 = vpop.f32.mrf.mxu0
        %775 = vdwg.mxu0
        %v776 = vld [vmem:[%s374] sm:$0xff]
        %777 = vmatprep.subr.mxu0 0.0
        %778 = vmatpush1.msra.mxu0 0.0
        %779 = vmatprep.subr.mxu0 0.0
        %780 = vmatpush1.msra.mxu0 0.0
        %781 = vmatprep.subr.mxu0 0.0
        %782 = vmatpush1.msra.mxu0 0.0
        %783 = vmatprep.subr.mxu0 0.0
        %784 = vmatpush1.msra.mxu0 0.0
        %785 = vmatprep.subr.mxu0 0.0
        %786 = vmatpush1.msra.mxu0 0.0
        %787 = vmatprep.subr.mxu0 0.0
        %788 = vmatpush1.msra.mxu0 0.0
        %789 = vmatprep.subr.mxu0 0.0
        %790 = vmatpush1.msra.mxu0 0.0
        %791 = vmatprep.subr.mxu0 0.0
        %792 = vmatpush1.msra.mxu0 0.0
        %793 = vmatprep.subr.mxu0 0.0
        %794 = vmatpush1.msra.mxu0 0.0
        %795 = vmatprep.subr.mxu0 0.0
        %796 = vmatpush1.msra.mxu0 0.0
        %797 = vmatprep.subr.mxu0 0.0
        %798 = vmatpush1.msra.mxu0 0.0
        %799 = vmatprep.subr.mxu0 0.0
        %800 = vmatpush1.msra.mxu0 0.0
        %801 = vmatprep.subr.mxu0 0.0
        %802 = vmatpush1.msra.mxu0 0.0
        %803 = vmatprep.subr.mxu0 0.0
        %804 = vmatpush1.msra.mxu0 0.0
        %805 = vmatprep.subr.mxu0 0.0
        %806 = vmatpush1.msra.mxu0 0.0
        %807 = vmatprep.subr.mxu0 0.0
        %808 = vmatpush1.msra.mxu0 %v776
        %809 = vmatprep.subr.mxu0 0.0
        %810 = vmatpush2.msra.mxu0 0.0
        %811 = vmatprep.subr.mxu0 0.0
        %812 = vmatpush2.msra.mxu0 0.0
        %813 = vmatprep.subr.mxu0 0.0
        %814 = vmatpush2.msra.mxu0 0.0
        %815 = vmatprep.subr.mxu0 0.0
        %816 = vmatpush2.msra.mxu0 0.0
        %817 = vmatprep.subr.mxu0 0.0
        %818 = vmatpush2.msra.mxu0 0.0
        %819 = vmatprep.subr.mxu0 0.0
        %820 = vmatpush2.msra.mxu0 0.0
        %821 = vmatprep.subr.mxu0 0.0
        %822 = vmatpush2.msra.mxu0 0.0
        %823 = vmatprep.subr.mxu0 0.0
        %824 = vmatpush2.msra.mxu0 0.0
        %825 = vmatprep.subr.mxu0 0.0
        %826 = vmatpush2.msra.mxu0 0.0
        %827 = vmatprep.subr.mxu0 0.0
        %828 = vmatpush2.msra.mxu0 0.0
        %829 = vmatprep.subr.mxu0 0.0
        %830 = vmatpush2.msra.mxu0 0.0
        %831 = vmatprep.subr.mxu0 0.0
        %832 = vmatpush2.msra.mxu0 0.0
        %833 = vmatprep.subr.mxu0 0.0
        %834 = vmatpush2.msra.mxu0 0.0
        %835 = vmatprep.subr.mxu0 0.0
        %836 = vmatpush2.msra.mxu0 0.0
        %837 = vmatprep.subr.mxu0 0.0
        %838 = vmatpush2.msra.mxu0 0.0
        %839 = vmatprep.subr.mxu0 0.0
        %840 = vmatpush2.msra.mxu0 0.0
        %841 = vmatprep.mubr.f32.mxu0 0.0
        %842 = vmatmul.mubr.f32.gmra.mxu0 %v614
        %v843 = vpop.f32.mrf.mxu0
        %v844 = vadd.f32 0.0, %v843
        %v845 = vpop.f32.mrf.mxu0
        %846 = vmatprep.mubr.f32.mxu0 0.0
        %847 = vmatmul.mubr.f32.gmra.mxu0 %v617
        %v848 = vpop.f32.mrf.mxu0
        %v849 = vadd.f32 0.0, %v848
        %v850 = vpop.f32.mrf.mxu0
        %851 = vdwg.mxu0
        %v853 = vsel %vm612, %v844, 0
        %v856 = vsel %vm612, %v849, 0
        %858 = vmatprep.subr.mxu0 0.0
        %859 = vmatpush1.msra.mxu0 0.0
        %860 = vmatprep.subr.mxu0 0.0
        %861 = vmatpush1.msra.mxu0 0.0
        %862 = vmatprep.subr.mxu0 0.0
        %863 = vmatpush1.msra.mxu0 0.0
        %864 = vmatprep.subr.mxu0 0.0
        %865 = vmatpush1.msra.mxu0 0.0
        %866 = vmatprep.subr.mxu0 0.0
        %867 = vmatpush1.msra.mxu0 0.0
        %868 = vmatprep.subr.mxu0 0.0
        %869 = vmatpush1.msra.mxu0 0.0
        %870 = vmatprep.subr.mxu0 0.0
        %871 = vmatpush1.msra.mxu0 0.0
        %872 = vmatprep.subr.mxu0 0.0
        %873 = vmatpush1.msra.mxu0 0.0
        %874 = vmatprep.subr.mxu0 0.0
        %875 = vmatpush1.msra.mxu0 0.0
        %876 = vmatprep.subr.mxu0 0.0
        %877 = vmatpush1.msra.mxu0 0.0
        %878 = vmatprep.subr.mxu0 0.0
        %879 = vmatpush1.msra.mxu0 0.0
        %880 = vmatprep.subr.mxu0 0.0
        %881 = vmatpush1.msra.mxu0 0.0
        %882 = vmatprep.subr.mxu0 0.0
        %883 = vmatpush1.msra.mxu0 0.0
        %884 = vmatprep.subr.mxu0 0.0
        %885 = vmatpush1.msra.mxu0 0.0
        %886 = vmatprep.subr.mxu0 0.0
        %887 = vmatpush1.msra.mxu0 0.0
        %888 = vmatprep.subr.mxu0 0.0
        %889 = vmatpush1.msra.mxu0 %v694
        %890 = vmatprep.subr.mxu0 0.0
        %891 = vmatpush2.msra.mxu0 0.0
        %892 = vmatprep.subr.mxu0 0.0
        %893 = vmatpush2.msra.mxu0 0.0
        %894 = vmatprep.subr.mxu0 0.0
        %895 = vmatpush2.msra.mxu0 0.0
        %896 = vmatprep.subr.mxu0 0.0
        %897 = vmatpush2.msra.mxu0 0.0
        %898 = vmatprep.subr.mxu0 0.0
        %899 = vmatpush2.msra.mxu0 0.0
        %900 = vmatprep.subr.mxu0 0.0
        %901 = vmatpush2.msra.mxu0 0.0
        %902 = vmatprep.subr.mxu0 0.0
        %903 = vmatpush2.msra.mxu0 0.0
        %904 = vmatprep.subr.mxu0 0.0
        %905 = vmatpush2.msra.mxu0 0.0
        %906 = vmatprep.subr.mxu0 0.0
        %907 = vmatpush2.msra.mxu0 0.0
        %908 = vmatprep.subr.mxu0 0.0
        %909 = vmatpush2.msra.mxu0 0.0
        %910 = vmatprep.subr.mxu0 0.0
        %911 = vmatpush2.msra.mxu0 0.0
        %912 = vmatprep.subr.mxu0 0.0
        %913 = vmatpush2.msra.mxu0 0.0
        %914 = vmatprep.subr.mxu0 0.0
        %915 = vmatpush2.msra.mxu0 0.0
        %916 = vmatprep.subr.mxu0 0.0
        %917 = vmatpush2.msra.mxu0 0.0
        %918 = vmatprep.subr.mxu0 0.0
        %919 = vmatpush2.msra.mxu0 0.0
        %920 = vmatprep.subr.mxu0 0.0
        %921 = vmatpush2.msra.mxu0 0.0
        %922 = vmatprep.mubr.f32.mxu0 0.0
        %923 = vmatmul.mubr.f32.gmra.mxu0 %v853
        %v924 = vpop.f32.mrf.mxu0
        %v925 = vadd.f32 0.0, %v924
        %v926 = vpop.f32.mrf.mxu0
        %927 = vmatprep.mubr.f32.mxu0 0.0
        %928 = vmatmul.mubr.f32.gmra.mxu0 %v856
        %v929 = vpop.f32.mrf.mxu0
        %v930 = vadd.f32 0.0, %v929
        %v931 = vpop.f32.mrf.mxu0
        %932 = vdwg.mxu0
        %v933 = vmul.f32 %v925, 1.402
        %v934 = vmul.f32 %v930, 1.402
        %v935 = vadd.f32 %v601, %v933
        %v936 = vadd.f32 %v606, %v934
        %v937 = vmul.f32 %v768, 0.344136
        %v938 = vmul.f32 %v773, 0.344136
        %v939 = vsub.f32 %v601, %v937
        %v940 = vsub.f32 %v606, %v938
        %v941 = vmul.f32 %v925, 0.714136
        %v942 = vmul.f32 %v930, 0.714136
        %v943 = vsub.f32 %v939, %v941
        %v944 = vsub.f32 %v940, %v942
        %v945 = vmul.f32 %v768, 1.772
        %v946 = vmul.f32 %v773, 1.772
        %v947 = vadd.f32 %v601, %v945
        %v948 = vadd.f32 %v606, %v946
        %v949 = vmax.f32 %v935, 0.0
        %v950 = vmax.f32 %v936, 0.0
        %v951 = vmin.f32 %v949, 255.0
        %v952 = vmin.f32 %v950, 255.0
        %v953 = vmul.f32 %v951, 0.003921569
        %v954 = vmul.f32 %v952, 0.003921569
        %955 = vst.msk [vmem:[%s427] sm:$0xff] %vm444, %v953
        %956 = vst.msk [vmem:[%s427 + $0x8] sm:$0xff] %vm444, %v954
        %v957 = vmax.f32 %v943, 0.0
        %v958 = vmax.f32 %v944, 0.0
        %v959 = vmin.f32 %v957, 255.0
        %v960 = vmin.f32 %v958, 255.0
        %v961 = vmul.f32 %v959, 0.003921569
        %v962 = vmul.f32 %v960, 0.003921569
        %s963 = scalar_lea.vmem %s427, 16 [#allocation10]
        %964 = vst.msk [vmem:[%s963] sm:$0xff] %vm444, %v961
        %965 = vst.msk [vmem:[%s963 + $0x8] sm:$0xff] %vm444, %v962
        %v966 = vmax.f32 %v947, 0.0
        %v967 = vmax.f32 %v948, 0.0
        %v968 = vmin.f32 %v966, 255.0
        %v969 = vmin.f32 %v967, 255.0
        %v970 = vmul.f32 %v968, 0.003921569
        %v971 = vmul.f32 %v969, 0.003921569
        %s972 = scalar_lea.vmem %s427, 32 [#allocation10]
        %973 = vst.msk [vmem:[%s972] sm:$0xff] %vm444, %v970
        %974 = vst.msk [vmem:[%s972 + $0x8] sm:$0xff] %vm444, %v971
        %s975 = sand.u32 %s233, 1
        %s976 = scalar_lea.sflag [#allocation4], %s975
        %s977 = sand.u32 %s233, 1
        %s978 = smul.addr %s977, 48
        %s979 = scalar_lea.vmem [#allocation10], %s978
        // Predicated region
        $region65: #{tpu_custom_call.1} parent=47 // pred_check
          %p980 = pneg %p243
        $region66: #{tpu_custom_call.1} parent=47 // pred_check_branch
          %982 = sbr.rel (%p980) target = $region68
        $region67: #{tpu_custom_call.1} parent=47 // pred_region
          %s983 = smul.u32 2, %s34
          %s985 = ssub.s32 768, 768
          %986 = vsyncadd %s976, %s985
          %s987 = sadd.s32 %s35, %s983
          %s988 = smul.addr %s33, 6
          %s989 = sadd.s32 %s987, %s988
          %s990 = smul.addr %s989, 128
          %s991 = scalar_lea.hbm %s7, %s990
          %s992 = sshll.u32 %s979, 4
          %s993 = int_to_ptr.vmem [resolvable:$true] %s992
          %998 = dma.vmem_to_hbm [thread:$0]  %s993, 768, %s991, %s976, 128, 128, 8
        $region68: #{tpu_custom_call.1} parent=47 // pred_fallthru
          _
      $region48: #{tpu_custom_call.1} parent=5 // pred_fallthru
        _
      %p999 = scmp.le.s32.totalorder 2, %s23
      // Predicated region
      $region69: #{tpu_custom_call.1} parent=5 // pred_check
        %p1000 = pneg %p999
      $region70: #{tpu_custom_call.1} parent=5 // pred_check_branch
        %1002 = sbr.rel (%p1000) target = $region72
      $region71: #{tpu_custom_call.1} parent=5 // pred_region
        %s1003 = ssub.s32 %s23, 2
        // Predicated region
        $region73: #{tpu_custom_call.1} parent=71 // pred_check
          %p1004 = pneg %p249
        $region74: #{tpu_custom_call.1} parent=71 // pred_check_branch
          %1006 = sbr.rel (%p1004) target = $region76
        $region75: #{tpu_custom_call.1} parent=71 // pred_region
          %s1007 = sand.u32 %s234, 1
          %s1008 = scalar_lea.sflag [#allocation4], %s1007
          %s1009 = sand.u32 %s234, 1
          %s1010 = smul.addr %s1009, 48
          %s1011 = scalar_lea.vmem [#allocation10], %s1010
          %1012 = dma.done %s1008, 768
        $region76: #{tpu_custom_call.1} parent=71 // pred_fallthru
          _
      $region72: #{tpu_custom_call.1} parent=5 // pred_fallthru
        _
    $region6: #{tpu_custom_call.1} parent=1 // loop_footer
      %s27 = sadd.s32 1, %s23
    $region7: #{tpu_custom_call.1} parent=1 // loop_footer_branch
      %22 = sbr.rel target = $region3
    $region8: #{tpu_custom_call.1} parent=1 // loop_exit
      _
    %1013 = vsyncpa [#allocation3], 1
    %s1014 = scalar_lea.sflag [#allocation3], 1
    %1015 = vsyncpa %s1014, 1
    %1016 = vsyncpa [#allocation6], 1
    %s1017 = scalar_lea.sflag [#allocation6], 1
    %1018 = vsyncpa %s1017, 1
    %1019 = vsyncpa [#allocation9], 1
    %1020 = vsyncpa [#allocation4], 1
    %s1021 = scalar_lea.sflag [#allocation4], 1
    %1022 = vsyncpa %s1021, 1

</llo_original>
